<compile_context>
chip_gen: v5e
topology: v5e:2x2
jax: 0.10.0
libtpu: 0.0.40
codegen_flags: <defaults>
</compile_context>

<pallas_src>
import functools

import jax
import jax.numpy as jnp
from jax.experimental import pallas as pl
from jax.experimental.pallas import tpu as pltpu

INPUT_DIM = 8
HIDDEN_DIM = 1000
OUTPUT_DIM = 2
HIDDEN_PAD = 1024            # 8 vregs wide
OUT_PAD = 128                # lane-dense output block
DROPOUT_P = 0.2
KEEP_SCALE = 1.0 / (1.0 - DROPOUT_P)
DROP_THRESHOLD = int(round(DROPOUT_P * float(2 ** 32)))  # bits < T  -> drop
LEAKY_SLOPE = 0.01           # F.leaky_relu default negative_slope


def _lr_kernel(seed_ref, x_ref, w1_ref, b1_ref, w2_ref, b2_ref, o_ref):
    i = pl.program_id(0)

    # ---- f1: x @ W1 + b1 (MXU) ----
    h = jnp.dot(x_ref[...], w1_ref[...], preferred_element_type=jnp.float32)
    h = h + b1_ref[...]                      # (1, HIDDEN_PAD) broadcasts

    # ---- leaky_relu ----
    h = jnp.where(h > 0.0, h, jnp.float32(LEAKY_SLOPE) * h)

    # ---- dropout(p=0.2), train-mode semantics of F.dropout ----
    # Stateless counter hash -> uniform uint32 bits, integer threshold keep.
    tb, hd = h.shape
    row = jax.lax.broadcasted_iota(jnp.int32, (tb, hd), 0).astype(jnp.uint32)
    col = jax.lax.broadcasted_iota(jnp.int32, (tb, hd), 1).astype(jnp.uint32)
    base = (i * tb).astype(jnp.uint32)       # global row offset of this tile
    idx = (base + row) * jnp.uint32(hd) + col
    seed = seed_ref[0].astype(jnp.uint32)
    z = idx * jnp.uint32(0x9E3779B1) + seed * jnp.uint32(0x85EBCA77)
    z = z ^ (z >> jnp.uint32(16))
    z = z * jnp.uint32(0x7FEB352D)
    z = z ^ (z >> jnp.uint32(15))
    z = z * jnp.uint32(0x846CA68B)
    z = z ^ (z >> jnp.uint32(16))
    keep = z >= jnp.uint32(DROP_THRESHOLD)   # P(keep) = 1 - p
    h = jnp.where(keep, h * jnp.float32(KEEP_SCALE), 0.0)

    # ---- f2: h @ W2 + b2 (MXU, lane-dense 128-wide output tile) ----
    logits = jnp.dot(h, w2_ref[...], preferred_element_type=jnp.float32)
    logits = logits + b2_ref[...]            # (1, OUT_PAD)

    # ---- sigmoid ----
    o_ref[...] = 1.0 / (1.0 + jnp.exp(-logits))


def _round_up(n, m):
    return ((n + m - 1) // m) * m


def _pad_params(w1, b1, w2, b2):
    w1p = jnp.pad(w1, ((0, 0), (0, HIDDEN_PAD - HIDDEN_DIM)))
    b1p = jnp.pad(b1, ((0, 0), (0, HIDDEN_PAD - HIDDEN_DIM)))
    w2p = jnp.pad(w2, ((0, HIDDEN_PAD - HIDDEN_DIM), (0, OUT_PAD - OUTPUT_DIM)))
    b2p = jnp.pad(b2, ((0, 0), (0, OUT_PAD - OUTPUT_DIM)))
    return w1p, b1p, w2p, b2p


@functools.partial(jax.jit, static_argnames=("tile_b",))
def logistic_regression_forward(x, w1, b1, w2, b2, seed, *, tile_b=256):
    """x: (B, 8) f32; seed: (1,) int32. Returns (B, 2) f32 sigmoid probs."""
    B = x.shape[0]
    w1p, b1p, w2p, b2p = _pad_params(w1, b1, w2, b2)

    # Batch tiling: small batches collapse to one tile; big batches stream.
    tb = min(tile_b, _round_up(B, 8))
    B_pad = _round_up(B, tb)
    if B_pad != B:
        x = jnp.pad(x, ((0, B_pad - B), (0, 0)))

    grid_spec = pltpu.PrefetchScalarGridSpec(
        num_scalar_prefetch=1,               # dropout seed lands in SMEM
        grid=(B_pad // tb,),
        in_specs=[
            pl.BlockSpec((tb, INPUT_DIM), lambda i, s: (i, 0)),        # x tile
            pl.BlockSpec((INPUT_DIM, HIDDEN_PAD), lambda i, s: (0, 0)),  # W1 (resident)
            pl.BlockSpec((1, HIDDEN_PAD), lambda i, s: (0, 0)),          # b1
            pl.BlockSpec((HIDDEN_PAD, OUT_PAD), lambda i, s: (0, 0)),    # W2 (resident)
            pl.BlockSpec((1, OUT_PAD), lambda i, s: (0, 0)),             # b2
        ],
        out_specs=pl.BlockSpec((tb, OUT_PAD), lambda i, s: (i, 0)),
    )

    out_padded = pl.pallas_call(
        _lr_kernel,
        out_shape=jax.ShapeDtypeStruct((B_pad, OUT_PAD), jnp.float32),
        grid_spec=grid_spec,
        compiler_params=pltpu.CompilerParams(
            dimension_semantics=("parallel",)),
    )(seed, x, w1p, b1p, w2p, b2p)

    return out_padded[:B, :OUTPUT_DIM]


def init_params(key):
    """Deterministic init mimicking nn.Linear's U(-1/sqrt(fan_in), 1/sqrt(fan_in))."""
    k1, k2, k3, k4 = jax.random.split(key, 4)
    bound1 = 1.0 / jnp.sqrt(jnp.float32(INPUT_DIM))
    bound2 = 1.0 / jnp.sqrt(jnp.float32(HIDDEN_DIM))
    w1 = jax.random.uniform(k1, (INPUT_DIM, HIDDEN_DIM), jnp.float32, -bound1, bound1)
    b1 = jax.random.uniform(k2, (1, HIDDEN_DIM), jnp.float32, -bound1, bound1)
    w2 = jax.random.uniform(k3, (HIDDEN_DIM, OUTPUT_DIM), jnp.float32, -bound2, bound2)
    b2 = jax.random.uniform(k4, (1, OUTPUT_DIM), jnp.float32, -bound2, bound2)
    return w1, b1, w2, b2


if __name__ == "__main__":
    key = jax.random.PRNGKey(0)
    k_params, k_x = jax.random.split(key)

    w1, b1, w2, b2 = init_params(k_params)

    batch = 8
    x = jax.random.normal(k_x, (batch, INPUT_DIM), jnp.float32)
    seed = jnp.array([0], dtype=jnp.int32)

    out = logistic_regression_forward(x, w1, b1, w2, b2, seed)
    out = jax.block_until_ready(out)

    assert out.shape == (batch, OUTPUT_DIM)
    assert out.dtype == jnp.float32
    assert bool(jnp.all((out >= 0.0) & (out <= 1.0)))
    print("KERNEL_OK")
</pallas_src>

<mosaic_0001>
module attributes {stable_mosaic.version = 11 : i64} {
  func.func @_lr_kernel(%arg0: i32, %arg1: memref<1xi32, #tpu.memory_space<smem>>, %arg2: memref<8x8xf32, #tpu.memory_space<vmem>>, %arg3: memref<8x1024xf32, #tpu.memory_space<vmem>>, %arg4: memref<1x1024xf32, #tpu.memory_space<vmem>>, %arg5: memref<1024x128xf32, #tpu.memory_space<vmem>>, %arg6: memref<1x128xf32, #tpu.memory_space<vmem>>, %arg7: memref<8x128xf32, #tpu.memory_space<vmem>>) attributes {dimension_semantics = [#tpu.dimension_semantics<parallel>], iteration_bounds = array<i64: 1>, scalar_prefetch = 1 : i64, scratch_operands = 0 : i64, tpu.core_type = #tpu.core_type<tc>, window_params = [{transform_indices = @transform_0, window_bounds = array<i64: 8, 8>}, {pipeline_mode = #tpu.pipeline_mode<synchronous>, transform_indices = @transform_1, window_bounds = array<i64: 8, 1024>}, {pipeline_mode = #tpu.pipeline_mode<synchronous>, transform_indices = @transform_2, window_bounds = array<i64: 1, 1024>}, {pipeline_mode = #tpu.pipeline_mode<synchronous>, transform_indices = @transform_3, window_bounds = array<i64: 1024, 128>}, {pipeline_mode = #tpu.pipeline_mode<synchronous>, transform_indices = @transform_4, window_bounds = array<i64: 1, 128>}, {transform_indices = @transform_5, window_bounds = array<i64: 8, 128>}]} {
    %c0 = arith.constant 0 : index
    %c0_0 = arith.constant 0 : index
    %0 = vector.load %arg2[%c0, %c0_0] : memref<8x8xf32, #tpu.memory_space<vmem>>, vector<8x8xf32>
    %c0_1 = arith.constant 0 : index
    %c0_2 = arith.constant 0 : index
    %1 = vector.load %arg3[%c0_1, %c0_2] : memref<8x1024xf32, #tpu.memory_space<vmem>>, vector<8x1024xf32>
    %cst = arith.constant dense<0.000000e+00> : vector<8x1024xf32>
    %2 = tpu.matmul %0, %1, %cst {dimension_numbers = #tpu.dot_dimension_numbers<[1], [0], [0], [1], [0, 0, 1, 1], [], []>} : vector<8x8xf32>, vector<8x1024xf32>, vector<8x1024xf32> -> vector<8x1024xf32>
    %c0_3 = arith.constant 0 : index
    %c0_4 = arith.constant 0 : index
    %3 = vector.load %arg4[%c0_3, %c0_4] : memref<1x1024xf32, #tpu.memory_space<vmem>>, vector<1x1024xf32>
    %4 = vector.broadcast %3 : vector<1x1024xf32> to vector<8x1024xf32>
    %5 = arith.addf %2, %4 : vector<8x1024xf32>
    %cst_5 = arith.constant 0.000000e+00 : f32
    %6 = vector.broadcast %cst_5 : f32 to vector<8x1024xf32>
    %7 = arith.cmpf ogt, %5, %6 : vector<8x1024xf32>
    %cst_6 = arith.constant 0.00999999977 : f32
    %8 = vector.broadcast %cst_6 : f32 to vector<8x1024xf32>
    %9 = arith.mulf %8, %5 : vector<8x1024xf32>
    %10 = arith.select %7, %5, %9 : vector<8x1024xi1>, vector<8x1024xf32>
    %11 = tpu.iota {dimensions = array<i32: 0>} : vector<8x1024xi32>
    %12 = tpu.iota {dimensions = array<i32: 1>} : vector<8x1024xi32>
    %c8_i32 = arith.constant 8 : i32
    %13 = arith.muli %arg0, %c8_i32 : i32
    %14 = vector.broadcast %13 : i32 to vector<8x1024xi32>
    %15 = arith.addi %14, %11 : vector<8x1024xi32>
    %c1024_i32 = arith.constant 1024 : i32
    %16 = vector.broadcast %c1024_i32 : i32 to vector<8x1024xi32>
    %17 = arith.muli %15, %16 : vector<8x1024xi32>
    %18 = arith.addi %17, %12 : vector<8x1024xi32>
    %c0_7 = arith.constant 0 : index
    %19 = memref.load %arg1[%c0_7] : memref<1xi32, #tpu.memory_space<smem>>
    %c-1640531535_i32 = arith.constant -1640531535 : i32
    %20 = vector.broadcast %c-1640531535_i32 : i32 to vector<8x1024xi32>
    %21 = arith.muli %18, %20 : vector<8x1024xi32>
    %c-2048144777_i32 = arith.constant -2048144777 : i32
    %22 = arith.muli %19, %c-2048144777_i32 : i32
    %23 = vector.broadcast %22 : i32 to vector<8x1024xi32>
    %24 = arith.addi %21, %23 : vector<8x1024xi32>
    %c16_i32 = arith.constant 16 : i32
    %25 = vector.broadcast %c16_i32 : i32 to vector<8x1024xi32>
    %26 = arith.shrui %24, %25 : vector<8x1024xi32>
    %27 = arith.xori %24, %26 : vector<8x1024xi32>
    %c2146121005_i32 = arith.constant 2146121005 : i32
    %28 = vector.broadcast %c2146121005_i32 : i32 to vector<8x1024xi32>
    %29 = arith.muli %27, %28 : vector<8x1024xi32>
    %c15_i32 = arith.constant 15 : i32
    %30 = vector.broadcast %c15_i32 : i32 to vector<8x1024xi32>
    %31 = arith.shrui %29, %30 : vector<8x1024xi32>
    %32 = arith.xori %29, %31 : vector<8x1024xi32>
    %c-2073254261_i32 = arith.constant -2073254261 : i32
    %33 = vector.broadcast %c-2073254261_i32 : i32 to vector<8x1024xi32>
    %34 = arith.muli %32, %33 : vector<8x1024xi32>
    %c16_i32_8 = arith.constant 16 : i32
    %35 = vector.broadcast %c16_i32_8 : i32 to vector<8x1024xi32>
    %36 = arith.shrui %34, %35 : vector<8x1024xi32>
    %37 = arith.xori %34, %36 : vector<8x1024xi32>
    %c858993459_i32 = arith.constant 858993459 : i32
    %38 = vector.broadcast %c858993459_i32 : i32 to vector<8x1024xi32>
    %39 = arith.cmpi uge, %37, %38 : vector<8x1024xi32>
    %cst_9 = arith.constant 1.250000e+00 : f32
    %40 = vector.broadcast %cst_9 : f32 to vector<8x1024xf32>
    %41 = arith.mulf %10, %40 : vector<8x1024xf32>
    %cst_10 = arith.constant 0.000000e+00 : f32
    %42 = vector.broadcast %cst_10 : f32 to vector<8x1024xf32>
    %43 = arith.select %39, %41, %42 : vector<8x1024xi1>, vector<8x1024xf32>
    %c0_11 = arith.constant 0 : index
    %c0_12 = arith.constant 0 : index
    %44 = vector.load %arg5[%c0_11, %c0_12] : memref<1024x128xf32, #tpu.memory_space<vmem>>, vector<1024x128xf32>
    %cst_13 = arith.constant dense<0.000000e+00> : vector<8x128xf32>
    %45 = tpu.matmul %43, %44, %cst_13 {dimension_numbers = #tpu.dot_dimension_numbers<[1], [0], [0], [1], [0, 0, 1, 1], [], []>} : vector<8x1024xf32>, vector<1024x128xf32>, vector<8x128xf32> -> vector<8x128xf32>
    %c0_14 = arith.constant 0 : index
    %c0_15 = arith.constant 0 : index
    %46 = vector.load %arg6[%c0_14, %c0_15] : memref<1x128xf32, #tpu.memory_space<vmem>>, vector<1x128xf32>
    %47 = vector.broadcast %46 : vector<1x128xf32> to vector<8x128xf32>
    %48 = arith.addf %45, %47 : vector<8x128xf32>
    %cst_16 = arith.constant 0.000000e+00 : f32
    %49 = vector.broadcast %cst_16 : f32 to vector<8x128xf32>
    %50 = arith.subf %49, %48 : vector<8x128xf32>
    %51 = math.exp %50 : vector<8x128xf32>
    %cst_17 = arith.constant 1.000000e+00 : f32
    %52 = vector.broadcast %cst_17 : f32 to vector<8x128xf32>
    %53 = arith.addf %52, %51 : vector<8x128xf32>
    %cst_18 = arith.constant 1.000000e+00 : f32
    %54 = vector.broadcast %cst_18 : f32 to vector<8x128xf32>
    %55 = arith.divf %54, %53 : vector<8x128xf32>
    %c0_19 = arith.constant 0 : index
    %c0_20 = arith.constant 0 : index
    %56 = vector.load %arg7[%c0_19, %c0_20] : memref<8x128xf32, #tpu.memory_space<vmem>>, vector<8x128xf32>
    tpu.vector_store %arg7[%c0_19, %c0_20], %55 {strides = array<i32>} : memref<8x128xf32, #tpu.memory_space<vmem>>, vector<8x128xf32>,
    return
  }
  func.func @transform_0(%arg0: i32, %arg1: memref<1xi32, #tpu.memory_space<smem>>) -> (i32, i32) {
    %c0_i32 = arith.constant 0 : i32
    %c0_i32_0 = arith.constant 0 : i32
    return %arg0, %c0_i32 : i32, i32
  }
  func.func @transform_1(%arg0: i32, %arg1: memref<1xi32, #tpu.memory_space<smem>>) -> (i32, i32) {
    %c0_i32 = arith.constant 0 : i32
    %c0_i32_0 = arith.constant 0 : i32
    %c0_i32_1 = arith.constant 0 : i32
    return %c0_i32, %c0_i32_0 : i32, i32
  }
  func.func @transform_2(%arg0: i32, %arg1: memref<1xi32, #tpu.memory_space<smem>>) -> (i32, i32) {
    %c0_i32 = arith.constant 0 : i32
    %c0_i32_0 = arith.constant 0 : i32
    %c0_i32_1 = arith.constant 0 : i32
    return %c0_i32, %c0_i32_0 : i32, i32
  }
  func.func @transform_3(%arg0: i32, %arg1: memref<1xi32, #tpu.memory_space<smem>>) -> (i32, i32) {
    %c0_i32 = arith.constant 0 : i32
    %c0_i32_0 = arith.constant 0 : i32
    %c0_i32_1 = arith.constant 0 : i32
    return %c0_i32, %c0_i32_0 : i32, i32
  }
  func.func @transform_4(%arg0: i32, %arg1: memref<1xi32, #tpu.memory_space<smem>>) -> (i32, i32) {
    %c0_i32 = arith.constant 0 : i32
    %c0_i32_0 = arith.constant 0 : i32
    %c0_i32_1 = arith.constant 0 : i32
    return %c0_i32, %c0_i32_0 : i32, i32
  }
  func.func @transform_5(%arg0: i32, %arg1: memref<1xi32, #tpu.memory_space<smem>>) -> (i32, i32) {
    %c0_i32 = arith.constant 0 : i32
    %c0_i32_0 = arith.constant 0 : i32
    return %arg0, %c0_i32 : i32, i32
  }
}

</mosaic_0001>

<llo_original>
// kernel: logistic_regression_forward.1
$region0: #{logistic_regression_forward.1}
  #allocation0 [shape = 'u32[]', space=smem, size = 0x4, offset = 0x4, fixed_abs, tag = 'smem constant byte address 0x4 - core index']
  #allocation1 [shape = 'u32[72,128]{1,0:T(1,128)}', space=vmem, size = 0x9000, scoped, tag = 'internal scratch']
  #allocation2 [shape = 's32[1]{0}', space=sflag, size = 0x4, scoped, tag = 'scoped memory for logistic_regression_forward.1']
  #allocation3 [shape = 's32[1]{0:T(128)S(6)}', space=smem, size = 0x200, scoped, tag = 'prefetched SMEM operand 0']
  %s0 = inlined_call_operand.<no memory space> [shape: s32[1], index: 0, kind: input, shape index: {}]
  %s1 = inlined_call_operand.vmem [shape: f32[8,8], index: 1, kind: input, shape index: {}]
  %s2 = inlined_call_operand.vmem [shape: f32[8,1024], index: 2, kind: input, shape index: {}]
  %s3 = inlined_call_operand.vmem [shape: f32[1,1024], index: 3, kind: input, shape index: {}]
  %s4 = inlined_call_operand.vmem [shape: f32[1024,128], index: 4, kind: input, shape index: {}]
  %s5 = inlined_call_operand.vmem [shape: f32[1,128], index: 5, kind: input, shape index: {}]
  %s6 = inlined_call_operand.vmem [shape: f32[8,128], index: 6, kind: output, shape index: {}]
  %s7 = sld [smem:[#allocation0]]
  $region30: #{logistic_regression_forward.1} parent=0
    _
  %s9 = ssub.s32 1, %s7
  %s10 = scalar_select 0, %s9, %s7
  %11 = sst [smem:[#allocation3]] %s0
  // Predicated region
  $region2: #{logistic_regression_forward.1} parent=0 // pred_check
    _
  $region3: #{logistic_regression_forward.1} parent=0 // pred_check_branch
    %13 = sbr.rel (0) target = $region5
  $region4: #{logistic_regression_forward.1} parent=0 // pred_region
    _
  $region5: #{logistic_regression_forward.1} parent=0 // pred_fallthru
    _
  // Predicated region
  $region6: #{logistic_regression_forward.1} parent=0 // pred_check
    _
  $region7: #{logistic_regression_forward.1} parent=0 // pred_check_branch
    %15 = sbr.rel (0) target = $region9
  $region8: #{logistic_regression_forward.1} parent=0 // pred_region
    _
  $region9: #{logistic_regression_forward.1} parent=0 // pred_fallthru
    _
  // Predicated region
  $region10: #{logistic_regression_forward.1} parent=0 // pred_check
    _
  $region11: #{logistic_regression_forward.1} parent=0 // pred_check_branch
    %17 = sbr.rel (0) target = $region13
  $region12: #{logistic_regression_forward.1} parent=0 // pred_region
    _
  $region13: #{logistic_regression_forward.1} parent=0 // pred_fallthru
    _
  // Predicated region
  $region14: #{logistic_regression_forward.1} parent=0 // pred_check
    _
  $region15: #{logistic_regression_forward.1} parent=0 // pred_check_branch
    %19 = sbr.rel (0) target = $region17
  $region16: #{logistic_regression_forward.1} parent=0 // pred_region
    _
  $region17: #{logistic_regression_forward.1} parent=0 // pred_fallthru
    _
  // Predicated region
  $region18: #{logistic_regression_forward.1} parent=0 // pred_check
    _
  $region19: #{logistic_regression_forward.1} parent=0 // pred_check_branch
    %21 = sbr.rel (0) target = $region21
  $region20: #{logistic_regression_forward.1} parent=0 // pred_region
    _
  $region21: #{logistic_regression_forward.1} parent=0 // pred_fallthru
    _
  %v22 = vld [vmem:[%s1] sm:$0xff]
  %v23 = vld [vmem:[%s2] sm:$0xff]
  %v24 = vld [vmem:[%s2 + $0x8] sm:$0xff]
  %v25 = vld [vmem:[%s2 + $0x10] sm:$0xff]
  %v26 = vld [vmem:[%s2 + $0x18] sm:$0xff]
  %v27 = vld [vmem:[%s2 + $0x20] sm:$0xff]
  %v28 = vld [vmem:[%s2 + $0x28] sm:$0xff]
  %v29 = vld [vmem:[%s2 + $0x30] sm:$0xff]
  %v30 = vld [vmem:[%s2 + $0x38] sm:$0xff]
  %v31 = vld [vmem:[%s3] sm:$0xff]
  %v33 = vperm.slane %v31, 0
  %v34 = vperm.slane %v31, 1
  %v35 = vperm.slane %v31, 2
  %v36 = vperm.slane %v31, 3
  %v37 = vperm.slane %v31, 4
  %v38 = vperm.slane %v31, 5
  %v39 = vperm.slane %v31, 6
  %v40 = vperm.slane %v31, 7
  %vm49 = vcmask 64512
  %v51 = vsel %vm49, %v22, 0
  %53 = vmatpush.msra.mxu0 0.0
  %54 = vmatpush.msra.mxu0 0.0
  %55 = vmatpush.msra.mxu0 0.0
  %56 = vmatpush.msra.mxu0 0.0
  %57 = vmatpush.msra.mxu0 0.0
  %58 = vmatpush.msra.mxu0 0.0
  %59 = vmatpush.msra.mxu0 0.0
  %60 = vmatpush.msra.mxu0 0.0
  %61 = vmatpush.msra.mxu0 0.0
  %62 = vmatpush.msra.mxu0 0.0
  %63 = vmatpush.msra.mxu0 0.0
  %64 = vmatpush.msra.mxu0 0.0
  %65 = vmatpush.msra.mxu0 0.0
  %66 = vmatpush.msra.mxu0 0.0
  %67 = vmatpush.msra.mxu0 0.0
  %68 = vmatpush.msra.mxu0 %v23
  %69 = vmatmul.f32.gmra.mxu0 %v51
  %v70 = vpop.f32.mrf.mxu0
  %v71 = vadd.f32 %v33, %v70
  %72 = vdwg.mxu0
  %73 = vmatpush.msra.mxu0 0.0
  %74 = vmatpush.msra.mxu0 0.0
  %75 = vmatpush.msra.mxu0 0.0
  %76 = vmatpush.msra.mxu0 0.0
  %77 = vmatpush.msra.mxu0 0.0
  %78 = vmatpush.msra.mxu0 0.0
  %79 = vmatpush.msra.mxu0 0.0
  %80 = vmatpush.msra.mxu0 0.0
  %81 = vmatpush.msra.mxu0 0.0
  %82 = vmatpush.msra.mxu0 0.0
  %83 = vmatpush.msra.mxu0 0.0
  %84 = vmatpush.msra.mxu0 0.0
  %85 = vmatpush.msra.mxu0 0.0
  %86 = vmatpush.msra.mxu0 0.0
  %87 = vmatpush.msra.mxu0 0.0
  %88 = vmatpush.msra.mxu0 %v24
  %89 = vmatmul.f32.gmra.mxu0 %v51
  %v90 = vpop.f32.mrf.mxu0
  %v91 = vadd.f32 %v34, %v90
  %92 = vdwg.mxu0
  %93 = vmatpush.msra.mxu0 0.0
  %94 = vmatpush.msra.mxu0 0.0
  %95 = vmatpush.msra.mxu0 0.0
  %96 = vmatpush.msra.mxu0 0.0
  %97 = vmatpush.msra.mxu0 0.0
  %98 = vmatpush.msra.mxu0 0.0
  %99 = vmatpush.msra.mxu0 0.0
  %100 = vmatpush.msra.mxu0 0.0
  %101 = vmatpush.msra.mxu0 0.0
  %102 = vmatpush.msra.mxu0 0.0
  %103 = vmatpush.msra.mxu0 0.0
  %104 = vmatpush.msra.mxu0 0.0
  %105 = vmatpush.msra.mxu0 0.0
  %106 = vmatpush.msra.mxu0 0.0
  %107 = vmatpush.msra.mxu0 0.0
  %108 = vmatpush.msra.mxu0 %v25
  %109 = vmatmul.f32.gmra.mxu0 %v51
  %v110 = vpop.f32.mrf.mxu0
  %v111 = vadd.f32 %v35, %v110
  %112 = vdwg.mxu0
  %113 = vmatpush.msra.mxu0 0.0
  %114 = vmatpush.msra.mxu0 0.0
  %115 = vmatpush.msra.mxu0 0.0
  %116 = vmatpush.msra.mxu0 0.0
  %117 = vmatpush.msra.mxu0 0.0
  %118 = vmatpush.msra.mxu0 0.0
  %119 = vmatpush.msra.mxu0 0.0
  %120 = vmatpush.msra.mxu0 0.0
  %121 = vmatpush.msra.mxu0 0.0
  %122 = vmatpush.msra.mxu0 0.0
  %123 = vmatpush.msra.mxu0 0.0
  %124 = vmatpush.msra.mxu0 0.0
  %125 = vmatpush.msra.mxu0 0.0
  %126 = vmatpush.msra.mxu0 0.0
  %127 = vmatpush.msra.mxu0 0.0
  %128 = vmatpush.msra.mxu0 %v26
  %129 = vmatmul.f32.gmra.mxu0 %v51
  %v130 = vpop.f32.mrf.mxu0
  %v131 = vadd.f32 %v36, %v130
  %132 = vdwg.mxu0
  %133 = vmatpush.msra.mxu0 0.0
  %134 = vmatpush.msra.mxu0 0.0
  %135 = vmatpush.msra.mxu0 0.0
  %136 = vmatpush.msra.mxu0 0.0
  %137 = vmatpush.msra.mxu0 0.0
  %138 = vmatpush.msra.mxu0 0.0
  %139 = vmatpush.msra.mxu0 0.0
  %140 = vmatpush.msra.mxu0 0.0
  %141 = vmatpush.msra.mxu0 0.0
  %142 = vmatpush.msra.mxu0 0.0
  %143 = vmatpush.msra.mxu0 0.0
  %144 = vmatpush.msra.mxu0 0.0
  %145 = vmatpush.msra.mxu0 0.0
  %146 = vmatpush.msra.mxu0 0.0
  %147 = vmatpush.msra.mxu0 0.0
  %148 = vmatpush.msra.mxu0 %v27
  %149 = vmatmul.f32.gmra.mxu0 %v51
  %v150 = vpop.f32.mrf.mxu0
  %v151 = vadd.f32 %v37, %v150
  %152 = vdwg.mxu0
  %153 = vmatpush.msra.mxu0 0.0
  %154 = vmatpush.msra.mxu0 0.0
  %155 = vmatpush.msra.mxu0 0.0
  %156 = vmatpush.msra.mxu0 0.0
  %157 = vmatpush.msra.mxu0 0.0
  %158 = vmatpush.msra.mxu0 0.0
  %159 = vmatpush.msra.mxu0 0.0
  %160 = vmatpush.msra.mxu0 0.0
  %161 = vmatpush.msra.mxu0 0.0
  %162 = vmatpush.msra.mxu0 0.0
  %163 = vmatpush.msra.mxu0 0.0
  %164 = vmatpush.msra.mxu0 0.0
  %165 = vmatpush.msra.mxu0 0.0
  %166 = vmatpush.msra.mxu0 0.0
  %167 = vmatpush.msra.mxu0 0.0
  %168 = vmatpush.msra.mxu0 %v28
  %169 = vmatmul.f32.gmra.mxu0 %v51
  %v170 = vpop.f32.mrf.mxu0
  %v171 = vadd.f32 %v38, %v170
  %172 = vdwg.mxu0
  %173 = vmatpush.msra.mxu0 0.0
  %174 = vmatpush.msra.mxu0 0.0
  %175 = vmatpush.msra.mxu0 0.0
  %176 = vmatpush.msra.mxu0 0.0
  %177 = vmatpush.msra.mxu0 0.0
  %178 = vmatpush.msra.mxu0 0.0
  %179 = vmatpush.msra.mxu0 0.0
  %180 = vmatpush.msra.mxu0 0.0
  %181 = vmatpush.msra.mxu0 0.0
  %182 = vmatpush.msra.mxu0 0.0
  %183 = vmatpush.msra.mxu0 0.0
  %184 = vmatpush.msra.mxu0 0.0
  %185 = vmatpush.msra.mxu0 0.0
  %186 = vmatpush.msra.mxu0 0.0
  %187 = vmatpush.msra.mxu0 0.0
  %188 = vmatpush.msra.mxu0 %v29
  %189 = vmatmul.f32.gmra.mxu0 %v51
  %v190 = vpop.f32.mrf.mxu0
  %v191 = vadd.f32 %v39, %v190
  %192 = vdwg.mxu0
  %193 = vmatpush.msra.mxu0 0.0
  %194 = vmatpush.msra.mxu0 0.0
  %195 = vmatpush.msra.mxu0 0.0
  %196 = vmatpush.msra.mxu0 0.0
  %197 = vmatpush.msra.mxu0 0.0
  %198 = vmatpush.msra.mxu0 0.0
  %199 = vmatpush.msra.mxu0 0.0
  %200 = vmatpush.msra.mxu0 0.0
  %201 = vmatpush.msra.mxu0 0.0
  %202 = vmatpush.msra.mxu0 0.0
  %203 = vmatpush.msra.mxu0 0.0
  %204 = vmatpush.msra.mxu0 0.0
  %205 = vmatpush.msra.mxu0 0.0
  %206 = vmatpush.msra.mxu0 0.0
  %207 = vmatpush.msra.mxu0 0.0
  %208 = vmatpush.msra.mxu0 %v30
  %209 = vmatmul.f32.gmra.mxu0 %v51
  %v210 = vpop.f32.mrf.mxu0
  %v211 = vadd.f32 %v40, %v210
  %212 = vdwg.mxu0
  %vm213 = vcmp.gt.f32.partialorder %v71, 0.0
  %vm214 = vcmp.gt.f32.partialorder %v91, 0.0
  %vm215 = vcmp.gt.f32.partialorder %v111, 0.0
  %vm216 = vcmp.gt.f32.partialorder %v131, 0.0
  %vm217 = vcmp.gt.f32.partialorder %v151, 0.0
  %vm218 = vcmp.gt.f32.partialorder %v171, 0.0
  %vm219 = vcmp.gt.f32.partialorder %v191, 0.0
  %vm220 = vcmp.gt.f32.partialorder %v211, 0.0
  %v221 = vmul.f32 %v71, 0.01
  %v222 = vmul.f32 %v91, 0.01
  %v223 = vmul.f32 %v111, 0.01
  %v224 = vmul.f32 %v131, 0.01
  %v225 = vmul.f32 %v151, 0.01
  %v226 = vmul.f32 %v171, 0.01
  %v227 = vmul.f32 %v191, 0.01
  %v228 = vmul.f32 %v211, 0.01
  %v229 = vsel %vm213, %v71, %v221
  %v230 = vsel %vm214, %v91, %v222
  %v231 = vsel %vm215, %v111, %v223
  %v232 = vsel %vm216, %v131, %v224
  %v233 = vsel %vm217, %v151, %v225
  %v234 = vsel %vm218, %v171, %v226
  %v235 = vsel %vm219, %v191, %v227
  %v236 = vsel %vm220, %v211, %v228
  %v237 = vlaneseq
  %v238 = vshrl.u32 %v237, 7
  %v239 = vlaneseq
  %v240 = vand.u32 %v239, 127
  %v241 = vadd.s32 %v240, 128
  %v242 = vadd.s32 %v240, 256
  %v243 = vadd.s32 %v240, 384
  %v244 = vadd.s32 %v240, 512
  %v245 = vadd.s32 %v240, 640
  %v246 = vadd.s32 %v240, 768
  %v247 = vadd.s32 %v240, 896
  %s248 = smul.u32 0, 8
  %v249 = vstv %s248
  %v250 = vadd.s32 %v249, %v238
  %v251 = vmul.u32 %v250, 1024
  %v252 = vadd.s32 %v251, %v240
  %v253 = vadd.s32 %v251, %v241
  %v254 = vadd.s32 %v251, %v242
  %v255 = vadd.s32 %v251, %v243
  %v256 = vadd.s32 %v251, %v244
  %v257 = vadd.s32 %v251, %v245
  %v258 = vadd.s32 %v251, %v246
  %v259 = vadd.s32 %v251, %v247
  %s260 = sld [smem:[#allocation3]]
  %v261 = vmul.u32 %v252, 2654435761
  %v262 = vmul.u32 %v253, 2654435761
  %v263 = vmul.u32 %v254, 2654435761
  %v264 = vmul.u32 %v255, 2654435761
  %v265 = vmul.u32 %v256, 2654435761
  %v266 = vmul.u32 %v257, 2654435761
  %v267 = vmul.u32 %v258, 2654435761
  %v268 = vmul.u32 %v259, 2654435761
  %s269 = smul.u32 %s260, 2246822519
  %v270 = vstv %s269
  %v271 = vadd.s32 %v261, %v270
  %v272 = vadd.s32 %v262, %v270
  %v273 = vadd.s32 %v263, %v270
  %v274 = vadd.s32 %v264, %v270
  %v275 = vadd.s32 %v265, %v270
  %v276 = vadd.s32 %v266, %v270
  %v277 = vadd.s32 %v267, %v270
  %v278 = vadd.s32 %v268, %v270
  %v279 = vshrl.u32 %v271, 16
  %v280 = vshrl.u32 %v272, 16
  %v281 = vshrl.u32 %v273, 16
  %v282 = vshrl.u32 %v274, 16
  %v283 = vshrl.u32 %v275, 16
  %v284 = vshrl.u32 %v276, 16
  %v285 = vshrl.u32 %v277, 16
  %v286 = vshrl.u32 %v278, 16
  %v287 = vxor.u32 %v271, %v279
  %v288 = vxor.u32 %v272, %v280
  %v289 = vxor.u32 %v273, %v281
  %v290 = vxor.u32 %v274, %v282
  %v291 = vxor.u32 %v275, %v283
  %v292 = vxor.u32 %v276, %v284
  %v293 = vxor.u32 %v277, %v285
  %v294 = vxor.u32 %v278, %v286
  %v295 = vmul.u32 %v287, 2146121005
  %v296 = vmul.u32 %v288, 2146121005
  %v297 = vmul.u32 %v289, 2146121005
  %v298 = vmul.u32 %v290, 2146121005
  %v299 = vmul.u32 %v291, 2146121005
  %v300 = vmul.u32 %v292, 2146121005
  %v301 = vmul.u32 %v293, 2146121005
  %v302 = vmul.u32 %v294, 2146121005
  %v303 = vshrl.u32 %v295, 15
  %v304 = vshrl.u32 %v296, 15
  %v305 = vshrl.u32 %v297, 15
  %v306 = vshrl.u32 %v298, 15
  %v307 = vshrl.u32 %v299, 15
  %v308 = vshrl.u32 %v300, 15
  %v309 = vshrl.u32 %v301, 15
  %v310 = vshrl.u32 %v302, 15
  %v311 = vxor.u32 %v295, %v303
  %v312 = vxor.u32 %v296, %v304
  %v313 = vxor.u32 %v297, %v305
  %v314 = vxor.u32 %v298, %v306
  %v315 = vxor.u32 %v299, %v307
  %v316 = vxor.u32 %v300, %v308
  %v317 = vxor.u32 %v301, %v309
  %v318 = vxor.u32 %v302, %v310
  %v319 = vmul.u32 %v311, 2221713035
  %v320 = vmul.u32 %v312, 2221713035
  %v321 = vmul.u32 %v313, 2221713035
  %v322 = vmul.u32 %v314, 2221713035
  %v323 = vmul.u32 %v315, 2221713035
  %v324 = vmul.u32 %v316, 2221713035
  %v325 = vmul.u32 %v317, 2221713035
  %v326 = vmul.u32 %v318, 2221713035
  %v327 = vshrl.u32 %v319, 16
  %v328 = vshrl.u32 %v320, 16
  %v329 = vshrl.u32 %v321, 16
  %v330 = vshrl.u32 %v322, 16
  %v331 = vshrl.u32 %v323, 16
  %v332 = vshrl.u32 %v324, 16
  %v333 = vshrl.u32 %v325, 16
  %v334 = vshrl.u32 %v326, 16
  %v335 = vxor.u32 %v319, %v327
  %v336 = vxor.u32 %v320, %v328
  %v337 = vxor.u32 %v321, %v329
  %v338 = vxor.u32 %v322, %v330
  %v339 = vxor.u32 %v323, %v331
  %v340 = vxor.u32 %v324, %v332
  %v341 = vxor.u32 %v325, %v333
  %v342 = vxor.u32 %v326, %v334
  %v343 = vadd.s32 %v335, 2147483648
  %vm345 = vcmp.ge.s32.totalorder %v343, 3006477107
  %v346 = vadd.s32 %v336, 2147483648
  %vm348 = vcmp.ge.s32.totalorder %v346, 3006477107
  %v349 = vadd.s32 %v337, 2147483648
  %vm351 = vcmp.ge.s32.totalorder %v349, 3006477107
  %v352 = vadd.s32 %v338, 2147483648
  %vm354 = vcmp.ge.s32.totalorder %v352, 3006477107
  %v355 = vadd.s32 %v339, 2147483648
  %vm357 = vcmp.ge.s32.totalorder %v355, 3006477107
  %v358 = vadd.s32 %v340, 2147483648
  %vm360 = vcmp.ge.s32.totalorder %v358, 3006477107
  %v361 = vadd.s32 %v341, 2147483648
  %vm363 = vcmp.ge.s32.totalorder %v361, 3006477107
  %v364 = vadd.s32 %v342, 2147483648
  %vm366 = vcmp.ge.s32.totalorder %v364, 3006477107
  %v367 = vmul.f32 %v229, 1.25
  %v368 = vmul.f32 %v230, 1.25
  %v369 = vmul.f32 %v231, 1.25
  %v370 = vmul.f32 %v232, 1.25
  %v371 = vmul.f32 %v233, 1.25
  %v372 = vmul.f32 %v234, 1.25
  %v373 = vmul.f32 %v235, 1.25
  %v374 = vmul.f32 %v236, 1.25
  %v375 = vsel %vm345, %v367, 0.0
  %v376 = vsel %vm348, %v368, 0.0
  %v377 = vsel %vm351, %v369, 0.0
  %v378 = vsel %vm354, %v370, 0.0
  %v379 = vsel %vm357, %v371, 0.0
  %v380 = vsel %vm360, %v372, 0.0
  %v381 = vsel %vm363, %v373, 0.0
  %v382 = vsel %vm366, %v374, 0.0
  %v383 = vld [vmem:[%s4] sm:$0xff]
  %v384 = vld [vmem:[%s4 + $0x8] sm:$0xff]
  %v385 = vld [vmem:[%s4 + $0x10] sm:$0xff]
  %v386 = vld [vmem:[%s4 + $0x18] sm:$0xff]
  %v387 = vld [vmem:[%s4 + $0x20] sm:$0xff]
  %v388 = vld [vmem:[%s4 + $0x28] sm:$0xff]
  %v389 = vld [vmem:[%s4 + $0x30] sm:$0xff]
  %v390 = vld [vmem:[%s4 + $0x38] sm:$0xff]
  %v391 = vld [vmem:[%s4 + $0x40] sm:$0xff]
  %v392 = vld [vmem:[%s4 + $0x48] sm:$0xff]
  %v393 = vld [vmem:[%s4 + $0x50] sm:$0xff]
  %v394 = vld [vmem:[%s4 + $0x58] sm:$0xff]
  %v395 = vld [vmem:[%s4 + $0x60] sm:$0xff]
  %v396 = vld [vmem:[%s4 + $0x68] sm:$0xff]
  %v397 = vld [vmem:[%s4 + $0x70] sm:$0xff]
  %v398 = vld [vmem:[%s4 + $0x78] sm:$0xff]
  %v399 = vld [vmem:[%s4 + $0x80] sm:$0xff]
  %v400 = vld [vmem:[%s4 + $0x88] sm:$0xff]
  %v401 = vld [vmem:[%s4 + $0x90] sm:$0xff]
  %v402 = vld [vmem:[%s4 + $0x98] sm:$0xff]
  %v403 = vld [vmem:[%s4 + $0xa0] sm:$0xff]
  %v404 = vld [vmem:[%s4 + $0xa8] sm:$0xff]
  %v405 = vld [vmem:[%s4 + $0xb0] sm:$0xff]
  %v406 = vld [vmem:[%s4 + $0xb8] sm:$0xff]
  %v407 = vld [vmem:[%s4 + $0xc0] sm:$0xff]
  %v408 = vld [vmem:[%s4 + $0xc8] sm:$0xff]
  %v409 = vld [vmem:[%s4 + $0xd0] sm:$0xff]
  %v410 = vld [vmem:[%s4 + $0xd8] sm:$0xff]
  %v411 = vld [vmem:[%s4 + $0xe0] sm:$0xff]
  %v412 = vld [vmem:[%s4 + $0xe8] sm:$0xff]
  %v413 = vld [vmem:[%s4 + $0xf0] sm:$0xff]
  %v414 = vld [vmem:[%s4 + $0xf8] sm:$0xff]
  %v415 = vld [vmem:[%s4 + $0x100] sm:$0xff]
  %v416 = vld [vmem:[%s4 + $0x108] sm:$0xff]
  %v417 = vld [vmem:[%s4 + $0x110] sm:$0xff]
  %v418 = vld [vmem:[%s4 + $0x118] sm:$0xff]
  %v419 = vld [vmem:[%s4 + $0x120] sm:$0xff]
  %v420 = vld [vmem:[%s4 + $0x128] sm:$0xff]
  %v421 = vld [vmem:[%s4 + $0x130] sm:$0xff]
  %v422 = vld [vmem:[%s4 + $0x138] sm:$0xff]
  %v423 = vld [vmem:[%s4 + $0x140] sm:$0xff]
  %v424 = vld [vmem:[%s4 + $0x148] sm:$0xff]
  %v425 = vld [vmem:[%s4 + $0x150] sm:$0xff]
  %v426 = vld [vmem:[%s4 + $0x158] sm:$0xff]
  %v427 = vld [vmem:[%s4 + $0x160] sm:$0xff]
  %v428 = vld [vmem:[%s4 + $0x168] sm:$0xff]
  %v429 = vld [vmem:[%s4 + $0x170] sm:$0xff]
  %v430 = vld [vmem:[%s4 + $0x178] sm:$0xff]
  %v431 = vld [vmem:[%s4 + $0x180] sm:$0xff]
  %v432 = vld [vmem:[%s4 + $0x188] sm:$0xff]
  %v433 = vld [vmem:[%s4 + $0x190] sm:$0xff]
  %v434 = vld [vmem:[%s4 + $0x198] sm:$0xff]
  %v435 = vld [vmem:[%s4 + $0x1a0] sm:$0xff]
  %v436 = vld [vmem:[%s4 + $0x1a8] sm:$0xff]
  %v437 = vld [vmem:[%s4 + $0x1b0] sm:$0xff]
  %v438 = vld [vmem:[%s4 + $0x1b8] sm:$0xff]
  %v439 = vld [vmem:[%s4 + $0x1c0] sm:$0xff]
  %v440 = vld [vmem:[%s4 + $0x1c8] sm:$0xff]
  %v441 = vld [vmem:[%s4 + $0x1d0] sm:$0xff]
  %v442 = vld [vmem:[%s4 + $0x1d8] sm:$0xff]
  %v443 = vld [vmem:[%s4 + $0x1e0] sm:$0xff]
  %v444 = vld [vmem:[%s4 + $0x1e8] sm:$0xff]
  %v445 = vld [vmem:[%s4 + $0x1f0] sm:$0xff]
  %v446 = vld [vmem:[%s4 + $0x1f8] sm:$0xff]
  %v447 = vld [vmem:[%s4 + $0x200] sm:$0xff]
  %v448 = vld [vmem:[%s4 + $0x208] sm:$0xff]
  %v449 = vld [vmem:[%s4 + $0x210] sm:$0xff]
  %v450 = vld [vmem:[%s4 + $0x218] sm:$0xff]
  %v451 = vld [vmem:[%s4 + $0x220] sm:$0xff]
  %v452 = vld [vmem:[%s4 + $0x228] sm:$0xff]
  %v453 = vld [vmem:[%s4 + $0x230] sm:$0xff]
  %v454 = vld [vmem:[%s4 + $0x238] sm:$0xff]
  %v455 = vld [vmem:[%s4 + $0x240] sm:$0xff]
  %v456 = vld [vmem:[%s4 + $0x248] sm:$0xff]
  %v457 = vld [vmem:[%s4 + $0x250] sm:$0xff]
  %v458 = vld [vmem:[%s4 + $0x258] sm:$0xff]
  %v459 = vld [vmem:[%s4 + $0x260] sm:$0xff]
  %v460 = vld [vmem:[%s4 + $0x268] sm:$0xff]
  %v461 = vld [vmem:[%s4 + $0x270] sm:$0xff]
  %v462 = vld [vmem:[%s4 + $0x278] sm:$0xff]
  %v463 = vld [vmem:[%s4 + $0x280] sm:$0xff]
  %v464 = vld [vmem:[%s4 + $0x288] sm:$0xff]
  %v465 = vld [vmem:[%s4 + $0x290] sm:$0xff]
  %v466 = vld [vmem:[%s4 + $0x298] sm:$0xff]
  %v467 = vld [vmem:[%s4 + $0x2a0] sm:$0xff]
  %v468 = vld [vmem:[%s4 + $0x2a8] sm:$0xff]
  %v469 = vld [vmem:[%s4 + $0x2b0] sm:$0xff]
  %v470 = vld [vmem:[%s4 + $0x2b8] sm:$0xff]
  %v471 = vld [vmem:[%s4 + $0x2c0] sm:$0xff]
  %v472 = vld [vmem:[%s4 + $0x2c8] sm:$0xff]
  %v473 = vld [vmem:[%s4 + $0x2d0] sm:$0xff]
  %v474 = vld [vmem:[%s4 + $0x2d8] sm:$0xff]
  %v475 = vld [vmem:[%s4 + $0x2e0] sm:$0xff]
  %v476 = vld [vmem:[%s4 + $0x2e8] sm:$0xff]
  %v477 = vld [vmem:[%s4 + $0x2f0] sm:$0xff]
  %v478 = vld [vmem:[%s4 + $0x2f8] sm:$0xff]
  %v479 = vld [vmem:[%s4 + $0x300] sm:$0xff]
  %v480 = vld [vmem:[%s4 + $0x308] sm:$0xff]
  %v481 = vld [vmem:[%s4 + $0x310] sm:$0xff]
  %v482 = vld [vmem:[%s4 + $0x318] sm:$0xff]
  %v483 = vld [vmem:[%s4 + $0x320] sm:$0xff]
  %v484 = vld [vmem:[%s4 + $0x328] sm:$0xff]
  %v485 = vld [vmem:[%s4 + $0x330] sm:$0xff]
  %v486 = vld [vmem:[%s4 + $0x338] sm:$0xff]
  %v487 = vld [vmem:[%s4 + $0x340] sm:$0xff]
  %v488 = vld [vmem:[%s4 + $0x348] sm:$0xff]
  %v489 = vld [vmem:[%s4 + $0x350] sm:$0xff]
  %v490 = vld [vmem:[%s4 + $0x358] sm:$0xff]
  %v491 = vld [vmem:[%s4 + $0x360] sm:$0xff]
  %v492 = vld [vmem:[%s4 + $0x368] sm:$0xff]
  %v493 = vld [vmem:[%s4 + $0x370] sm:$0xff]
  %v494 = vld [vmem:[%s4 + $0x378] sm:$0xff]
  %v495 = vld [vmem:[%s4 + $0x380] sm:$0xff]
  %v496 = vld [vmem:[%s4 + $0x388] sm:$0xff]
  %v497 = vld [vmem:[%s4 + $0x390] sm:$0xff]
  %v498 = vld [vmem:[%s4 + $0x398] sm:$0xff]
  %v499 = vld [vmem:[%s4 + $0x3a0] sm:$0xff]
  %v500 = vld [vmem:[%s4 + $0x3a8] sm:$0xff]
  %v501 = vld [vmem:[%s4 + $0x3b0] sm:$0xff]
  %v502 = vld [vmem:[%s4 + $0x3b8] sm:$0xff]
  %v503 = vld [vmem:[%s4 + $0x3c0] sm:$0xff]
  %v504 = vld [vmem:[%s4 + $0x3c8] sm:$0xff]
  %v505 = vld [vmem:[%s4 + $0x3d0] sm:$0xff]
  %v506 = vld [vmem:[%s4 + $0x3d8] sm:$0xff]
  %v507 = vld [vmem:[%s4 + $0x3e0] sm:$0xff]
  %v508 = vld [vmem:[%s4 + $0x3e8] sm:$0xff]
  %v509 = vld [vmem:[%s4 + $0x3f0] sm:$0xff]
  %v510 = vld [vmem:[%s4 + $0x3f8] sm:$0xff]
  %v511 = vld [vmem:[%s5] sm:$0x1]
  %v513 = vperm.slane %v511, 0
  %515 = vmatpush.msra.mxu0 %v398
  %516 = vmatpush.msra.mxu0 %v397
  %517 = vmatpush.msra.mxu0 %v396
  %518 = vmatpush.msra.mxu0 %v395
  %519 = vmatpush.msra.mxu0 %v394
  %520 = vmatpush.msra.mxu0 %v393
  %521 = vmatpush.msra.mxu0 %v392
  %522 = vmatpush.msra.mxu0 %v391
  %523 = vmatpush.msra.mxu0 %v390
  %524 = vmatpush.msra.mxu0 %v389
  %525 = vmatpush.msra.mxu0 %v388
  %526 = vmatpush.msra.mxu0 %v387
  %527 = vmatpush.msra.mxu0 %v386
  %528 = vmatpush.msra.mxu0 %v385
  %529 = vmatpush.msra.mxu0 %v384
  %530 = vmatpush.msra.mxu0 %v383
  %531 = vmatmul.f32.gmra.mxu0 %v375
  %v532 = vpop.f32.mrf.mxu0
  %v533 = vadd.f32 %v513, %v532
  %534 = vdwg.mxu0
  %535 = vmatpush.msra.mxu0 %v414
  %536 = vmatpush.msra.mxu0 %v413
  %537 = vmatpush.msra.mxu0 %v412
  %538 = vmatpush.msra.mxu0 %v411
  %539 = vmatpush.msra.mxu0 %v410
  %540 = vmatpush.msra.mxu0 %v409
  %541 = vmatpush.msra.mxu0 %v408
  %542 = vmatpush.msra.mxu0 %v407
  %543 = vmatpush.msra.mxu0 %v406
  %544 = vmatpush.msra.mxu0 %v405
  %545 = vmatpush.msra.mxu0 %v404
  %546 = vmatpush.msra.mxu0 %v403
  %547 = vmatpush.msra.mxu0 %v402
  %548 = vmatpush.msra.mxu0 %v401
  %549 = vmatpush.msra.mxu0 %v400
  %550 = vmatpush.msra.mxu0 %v399
  %551 = vmatmul.f32.gmra.mxu0 %v376
  %v552 = vpop.f32.mrf.mxu0
  %v553 = vadd.f32 %v533, %v552
  %554 = vdwg.mxu0
  %555 = vmatpush.msra.mxu0 %v430
  %556 = vmatpush.msra.mxu0 %v429
  %557 = vmatpush.msra.mxu0 %v428
  %558 = vmatpush.msra.mxu0 %v427
  %559 = vmatpush.msra.mxu0 %v426
  %560 = vmatpush.msra.mxu0 %v425
  %561 = vmatpush.msra.mxu0 %v424
  %562 = vmatpush.msra.mxu0 %v423
  %563 = vmatpush.msra.mxu0 %v422
  %564 = vmatpush.msra.mxu0 %v421
  %565 = vmatpush.msra.mxu0 %v420
  %566 = vmatpush.msra.mxu0 %v419
  %567 = vmatpush.msra.mxu0 %v418
  %568 = vmatpush.msra.mxu0 %v417
  %569 = vmatpush.msra.mxu0 %v416
  %570 = vmatpush.msra.mxu0 %v415
  %571 = vmatmul.f32.gmra.mxu0 %v377
  %v572 = vpop.f32.mrf.mxu0
  %v573 = vadd.f32 %v553, %v572
  %574 = vdwg.mxu0
  %575 = vmatpush.msra.mxu0 %v446
  %576 = vmatpush.msra.mxu0 %v445
  %577 = vmatpush.msra.mxu0 %v444
  %578 = vmatpush.msra.mxu0 %v443
  %579 = vmatpush.msra.mxu0 %v442
  %580 = vmatpush.msra.mxu0 %v441
  %581 = vmatpush.msra.mxu0 %v440
  %582 = vmatpush.msra.mxu0 %v439
  %583 = vmatpush.msra.mxu0 %v438
  %584 = vmatpush.msra.mxu0 %v437
  %585 = vmatpush.msra.mxu0 %v436
  %586 = vmatpush.msra.mxu0 %v435
  %587 = vmatpush.msra.mxu0 %v434
  %588 = vmatpush.msra.mxu0 %v433
  %589 = vmatpush.msra.mxu0 %v432
  %590 = vmatpush.msra.mxu0 %v431
  %591 = vmatmul.f32.gmra.mxu0 %v378
  %v592 = vpop.f32.mrf.mxu0
  %v593 = vadd.f32 %v573, %v592
  %594 = vdwg.mxu0
  %595 = vmatpush.msra.mxu0 %v462
  %596 = vmatpush.msra.mxu0 %v461
  %597 = vmatpush.msra.mxu0 %v460
  %598 = vmatpush.msra.mxu0 %v459
  %599 = vmatpush.msra.mxu0 %v458
  %600 = vmatpush.msra.mxu0 %v457
  %601 = vmatpush.msra.mxu0 %v456
  %602 = vmatpush.msra.mxu0 %v455
  %603 = vmatpush.msra.mxu0 %v454
  %604 = vmatpush.msra.mxu0 %v453
  %605 = vmatpush.msra.mxu0 %v452
  %606 = vmatpush.msra.mxu0 %v451
  %607 = vmatpush.msra.mxu0 %v450
  %608 = vmatpush.msra.mxu0 %v449
  %609 = vmatpush.msra.mxu0 %v448
  %610 = vmatpush.msra.mxu0 %v447
  %611 = vmatmul.f32.gmra.mxu0 %v379
  %v612 = vpop.f32.mrf.mxu0
  %v613 = vadd.f32 %v593, %v612
  %614 = vdwg.mxu0
  %615 = vmatpush.msra.mxu0 %v478
  %616 = vmatpush.msra.mxu0 %v477
  %617 = vmatpush.msra.mxu0 %v476
  %618 = vmatpush.msra.mxu0 %v475
  %619 = vmatpush.msra.mxu0 %v474
  %620 = vmatpush.msra.mxu0 %v473
  %621 = vmatpush.msra.mxu0 %v472
  %622 = vmatpush.msra.mxu0 %v471
  %623 = vmatpush.msra.mxu0 %v470
  %624 = vmatpush.msra.mxu0 %v469
  %625 = vmatpush.msra.mxu0 %v468
  %626 = vmatpush.msra.mxu0 %v467
  %627 = vmatpush.msra.mxu0 %v466
  %628 = vmatpush.msra.mxu0 %v465
  %629 = vmatpush.msra.mxu0 %v464
  %630 = vmatpush.msra.mxu0 %v463
  %631 = vmatmul.f32.gmra.mxu0 %v380
  %v632 = vpop.f32.mrf.mxu0
  %v633 = vadd.f32 %v613, %v632
  %634 = vdwg.mxu0
  %635 = vmatpush.msra.mxu0 %v494
  %636 = vmatpush.msra.mxu0 %v493
  %637 = vmatpush.msra.mxu0 %v492
  %638 = vmatpush.msra.mxu0 %v491
  %639 = vmatpush.msra.mxu0 %v490
  %640 = vmatpush.msra.mxu0 %v489
  %641 = vmatpush.msra.mxu0 %v488
  %642 = vmatpush.msra.mxu0 %v487
  %643 = vmatpush.msra.mxu0 %v486
  %644 = vmatpush.msra.mxu0 %v485
  %645 = vmatpush.msra.mxu0 %v484
  %646 = vmatpush.msra.mxu0 %v483
  %647 = vmatpush.msra.mxu0 %v482
  %648 = vmatpush.msra.mxu0 %v481
  %649 = vmatpush.msra.mxu0 %v480
  %650 = vmatpush.msra.mxu0 %v479
  %651 = vmatmul.f32.gmra.mxu0 %v381
  %v652 = vpop.f32.mrf.mxu0
  %v653 = vadd.f32 %v633, %v652
  %654 = vdwg.mxu0
  %655 = vmatpush.msra.mxu0 %v510
  %656 = vmatpush.msra.mxu0 %v509
  %657 = vmatpush.msra.mxu0 %v508
  %658 = vmatpush.msra.mxu0 %v507
  %659 = vmatpush.msra.mxu0 %v506
  %660 = vmatpush.msra.mxu0 %v505
  %661 = vmatpush.msra.mxu0 %v504
  %662 = vmatpush.msra.mxu0 %v503
  %663 = vmatpush.msra.mxu0 %v502
  %664 = vmatpush.msra.mxu0 %v501
  %665 = vmatpush.msra.mxu0 %v500
  %666 = vmatpush.msra.mxu0 %v499
  %667 = vmatpush.msra.mxu0 %v498
  %668 = vmatpush.msra.mxu0 %v497
  %669 = vmatpush.msra.mxu0 %v496
  %670 = vmatpush.msra.mxu0 %v495
  %671 = vmatmul.f32.gmra.mxu0 %v382
  %v672 = vpop.f32.mrf.mxu0
  %v673 = vadd.f32 %v653, %v672
  %674 = vdwg.mxu0
  %v675 = vsub.f32 0.0, %v673
  %v676 = vmul.f32 %v675, 1.442695
  %v677 = vpow.pop %v676
  %v678 = vadd.f32 %v677, 1.0
  %v679 = vrcp.pop %v678
  %v680 = vmul.f32 %v678, %v679
  %v681 = vsub.f32 1.0, %v680
  %v682 = vmul.f32 %v679, %v681
  %v683 = vadd.f32 %v679, %v682
  %vm684 = vweird.f32 %v678
  %vm685 = vweird.f32 %v679
  %vm686 = vmor %vm684, %vm685
  %v687 = vsel %vm686, %v679, %v683
  %v688 = vand.u32 2147483647, %v678
  %vm689 = vcmp.eq.f32.partialorder %v688, 8.507059e+37
  %v690 = vand.u32 %v678, 2147483648
  %v691 = vor.u32 1.1754944e-38, %v690
  %v692 = vsel %vm689, %v691, %v687
  %v693 = vmul.f32 1.0, %v692
  %694 = vst [vmem:[%s6] sm:$0xff] %v693
  // Predicated region
  $region22: #{logistic_regression_forward.1} parent=0 // pred_check
    _
  $region23: #{logistic_regression_forward.1} parent=0 // pred_check_branch
    %696 = sbr.rel (0) target = $region25
  $region24: #{logistic_regression_forward.1} parent=0 // pred_region
    _
  $region25: #{logistic_regression_forward.1} parent=0 // pred_fallthru
    _
  // Predicated region
  $region26: #{logistic_regression_forward.1} parent=0 // pred_check
    _
  $region27: #{logistic_regression_forward.1} parent=0 // pred_check_branch
    %698 = sbr.rel (0) target = $region29
  $region28: #{logistic_regression_forward.1} parent=0 // pred_region
    _
  $region29: #{logistic_regression_forward.1} parent=0 // pred_fallthru
    _

</llo_original>
